<compile_context>
chip_gen: v5e
topology: v5e:2x2
jax: 0.10.0
libtpu: 0.0.40
codegen_flags: <defaults>
</compile_context>

<pallas_src>
import jax
import jax.numpy as jnp
from jax.experimental import pallas as pl
from jax.experimental.pallas import tpu as pltpu


# ----------------------------------------------------------------------------
# Fused GCN kernel: out = W2 @ relu(x @ W1^T + b1 + x)   (per batch element)
# ----------------------------------------------------------------------------
def _gcn_kernel(x_ref, w1t_ref, b1_ref, w2_ref, o_ref):
    x = x_ref[0]                      # (S, N)  float32
    w1t = w1t_ref[...]                # (N, N)  = W1^T
    b1 = b1_ref[...]                  # (1, N)
    w2 = w2_ref[...]                  # (S, S)

    # conv1 (1x1 over node dim) + bias + residual + ReLU, all in-register.
    h = jnp.dot(x, w1t, preferred_element_type=jnp.float32) + b1 + x
    h = jnp.maximum(h, 0.0)

    # conv2 (1x1 over state dim).
    o_ref[0] = jnp.dot(w2, h, preferred_element_type=jnp.float32)


@jax.jit
def gcn_forward(x, w1, b1, w2):
    """x: (B, S, N) f32;  w1: (N, N), b1: (N,) for conv1;  w2: (S, S) for conv2."""
    B, S, N = x.shape
    w1t = jnp.transpose(w1)           # tiny one-time transpose in the wrapper
    b1r = b1.reshape(1, N)

    return pl.pallas_call(
        _gcn_kernel,
        out_shape=jax.ShapeDtypeStruct((B, S, N), jnp.float32),
        grid=(B,),
        in_specs=[
            pl.BlockSpec((1, S, N), lambda b: (b, 0, 0)),   # x    : per-batch block
            pl.BlockSpec((N, N), lambda b: (0, 0)),         # W1^T : resident
            pl.BlockSpec((1, N), lambda b: (0, 0)),         # b1   : resident
            pl.BlockSpec((S, S), lambda b: (0, 0)),         # W2   : resident
        ],
        out_specs=pl.BlockSpec((1, S, N), lambda b: (b, 0, 0)),
        compiler_params=pltpu.CompilerParams(
            dimension_semantics=("parallel",),              # batch axis shards across TCs (v7x)
        ),
    )(x, w1t, b1r, w2)


# ----------------------------------------------------------------------------
# Pure-JAX reference (same math, no Pallas) for verification
# ----------------------------------------------------------------------------
def reference_forward(x, w1, b1, w2):
    # conv1 on x.permute(0,2,1), then permute back:
    #   h[b, s, i] = sum_j w1[i, j] * x[b, s, j] + b1[i]
    h = jnp.einsum("bsj,ij->bsi", x, w1, precision=jax.lax.Precision.HIGHEST) + b1
    h = jnp.maximum(h + x, 0.0)
    # conv2: out[b, c, n] = sum_d w2[c, d] * h[b, d, n]
    out = jnp.einsum("cd,bdn->bcn", w2, h, precision=jax.lax.Precision.HIGHEST)
    return out


if __name__ == "__main__":
    key = jax.random.PRNGKey(0)
    B, S, N = 2, 128, 128             # batch, num_state, num_node (lane-dense N)
    k = jax.random.split(key, 4)

    x = jax.random.normal(k[0], (B, S, N), jnp.float32)
    w1 = jax.random.normal(k[1], (N, N), jnp.float32) * (1.0 / N) ** 0.5
    b1 = 0.1 * jax.random.normal(k[2], (N,), jnp.float32)
    w2 = jax.random.normal(k[3], (S, S), jnp.float32) * (1.0 / S) ** 0.5

    out = gcn_forward(x, w1, b1, w2)
    out = jax.block_until_ready(out)

    ref = reference_forward(x, w1, b1, w2)
    assert out.shape == (B, S, N)
    max_err = float(jnp.max(jnp.abs(out - ref)))
    assert jnp.allclose(out, ref, atol=2e-2, rtol=2e-2), f"max abs err {max_err}"

    print("KERNEL_OK")
</pallas_src>

<mosaic_0001>
module attributes {stable_mosaic.version = 11 : i64} {
  func.func @_gcn_kernel(%arg0: i32, %arg1: memref<1x128x128xf32, #tpu.memory_space<vmem>>, %arg2: memref<128x128xf32, #tpu.memory_space<vmem>>, %arg3: memref<1x128xf32, #tpu.memory_space<vmem>>, %arg4: memref<128x128xf32, #tpu.memory_space<vmem>>, %arg5: memref<1x128x128xf32, #tpu.memory_space<vmem>>) attributes {dimension_semantics = [#tpu.dimension_semantics<parallel>], iteration_bounds = array<i64: 2>, scalar_prefetch = 0 : i64, scratch_operands = 0 : i64, tpu.core_type = #tpu.core_type<tc>, window_params = [{transform_indices = @transform_0, window_bounds = array<i64: 1, 128, 128>}, {pipeline_mode = #tpu.pipeline_mode<synchronous>, transform_indices = @transform_1, window_bounds = array<i64: 128, 128>}, {pipeline_mode = #tpu.pipeline_mode<synchronous>, transform_indices = @transform_2, window_bounds = array<i64: 1, 128>}, {pipeline_mode = #tpu.pipeline_mode<synchronous>, transform_indices = @transform_3, window_bounds = array<i64: 128, 128>}, {transform_indices = @transform_4, window_bounds = array<i64: 1, 128, 128>}]} {
    %c0 = arith.constant 0 : index
    %c0_0 = arith.constant 0 : index
    %c0_1 = arith.constant 0 : index
    %0 = vector.load %arg1[%c0, %c0_0, %c0_1] : memref<1x128x128xf32, #tpu.memory_space<vmem>>, vector<1x128x128xf32>
    %1 = vector.shape_cast %0 : vector<1x128x128xf32> to vector<128x128xf32>
    %c0_2 = arith.constant 0 : index
    %c0_3 = arith.constant 0 : index
    %2 = vector.load %arg2[%c0_2, %c0_3] : memref<128x128xf32, #tpu.memory_space<vmem>>, vector<128x128xf32>
    %c0_4 = arith.constant 0 : index
    %c0_5 = arith.constant 0 : index
    %3 = vector.load %arg3[%c0_4, %c0_5] : memref<1x128xf32, #tpu.memory_space<vmem>>, vector<1x128xf32>
    %c0_6 = arith.constant 0 : index
    %c0_7 = arith.constant 0 : index
    %4 = vector.load %arg4[%c0_6, %c0_7] : memref<128x128xf32, #tpu.memory_space<vmem>>, vector<128x128xf32>
    %cst = arith.constant dense<0.000000e+00> : vector<128x128xf32>
    %5 = tpu.matmul %1, %2, %cst {dimension_numbers = #tpu.dot_dimension_numbers<[1], [0], [0], [1], [0, 0, 1, 1], [], []>} : vector<128x128xf32>, vector<128x128xf32>, vector<128x128xf32> -> vector<128x128xf32>
    %6 = vector.broadcast %3 : vector<1x128xf32> to vector<128x128xf32>
    %7 = arith.addf %5, %6 : vector<128x128xf32>
    %8 = arith.addf %7, %1 : vector<128x128xf32>
    %cst_8 = arith.constant 0.000000e+00 : f32
    %9 = vector.broadcast %cst_8 : f32 to vector<128x128xf32>
    %10 = arith.maximumf %8, %9 : vector<128x128xf32>
    %cst_9 = arith.constant dense<0.000000e+00> : vector<128x128xf32>
    %11 = tpu.matmul %4, %10, %cst_9 {dimension_numbers = #tpu.dot_dimension_numbers<[1], [0], [0], [1], [0, 0, 1, 1], [], []>} : vector<128x128xf32>, vector<128x128xf32>, vector<128x128xf32> -> vector<128x128xf32>
    %c0_10 = arith.constant 0 : index
    %c0_11 = arith.constant 0 : index
    %c0_12 = arith.constant 0 : index
    %12 = vector.load %arg5[%c0_10, %c0_11, %c0_12] : memref<1x128x128xf32, #tpu.memory_space<vmem>>, vector<1x128x128xf32>
    %13 = vector.shape_cast %12 : vector<1x128x128xf32> to vector<128x128xf32>
    %14 = vector.shape_cast %11 : vector<128x128xf32> to vector<1x128x128xf32>
    tpu.vector_store %arg5[%c0_10, %c0_11, %c0_12], %14 {strides = array<i32>} : memref<1x128x128xf32, #tpu.memory_space<vmem>>, vector<1x128x128xf32>,
    return
  }
  func.func @transform_0(%arg0: i32) -> (i32, i32, i32) {
    %c0_i32 = arith.constant 0 : i32
    %c0_i32_0 = arith.constant 0 : i32
    %c0_i32_1 = arith.constant 0 : i32
    return %arg0, %c0_i32, %c0_i32_0 : i32, i32, i32
  }
  func.func @transform_1(%arg0: i32) -> (i32, i32) {
    %c0_i32 = arith.constant 0 : i32
    %c0_i32_0 = arith.constant 0 : i32
    %c0_i32_1 = arith.constant 0 : i32
    return %c0_i32, %c0_i32_0 : i32, i32
  }
  func.func @transform_2(%arg0: i32) -> (i32, i32) {
    %c0_i32 = arith.constant 0 : i32
    %c0_i32_0 = arith.constant 0 : i32
    %c0_i32_1 = arith.constant 0 : i32
    return %c0_i32, %c0_i32_0 : i32, i32
  }
  func.func @transform_3(%arg0: i32) -> (i32, i32) {
    %c0_i32 = arith.constant 0 : i32
    %c0_i32_0 = arith.constant 0 : i32
    %c0_i32_1 = arith.constant 0 : i32
    return %c0_i32, %c0_i32_0 : i32, i32
  }
  func.func @transform_4(%arg0: i32) -> (i32, i32, i32) {
    %c0_i32 = arith.constant 0 : i32
    %c0_i32_0 = arith.constant 0 : i32
    %c0_i32_1 = arith.constant 0 : i32
    return %arg0, %c0_i32, %c0_i32_0 : i32, i32, i32
  }
}

</mosaic_0001>

<llo_original>
// kernel: gcn_forward.1
$region0: #{gcn_forward.1}
  #allocation0 [shape = 'u32[]', space=smem, size = 0x4, offset = 0x4, fixed_abs, tag = 'smem constant byte address 0x4 - core index']
  #allocation1 [shape = 'u32[72,128]{1,0:T(1,128)}', space=vmem, size = 0x9000, scoped, tag = 'internal scratch']
  %s0 = inlined_call_operand.vmem [shape: f32[2,128,128], index: 0, kind: input, shape index: {}]
  %s1 = inlined_call_operand.vmem [shape: f32[128,128], index: 1, kind: input, shape index: {}]
  %s2 = inlined_call_operand.vmem [shape: f32[1,128], index: 2, kind: input, shape index: {}]
  %s3 = inlined_call_operand.hbm [shape: f32[128,128], index: 3, kind: input, shape index: {}]
  %s4 = inlined_call_operand.hbm [shape: f32[2,128,128], index: 4, kind: output, shape index: {}]
  %s5 = sld [smem:[#allocation0]]
  $region53: #{gcn_forward.1} parent=0
    _
  %s7 = ssub.s32 1, %s5
  %s8 = scalar_select 0, %s7, %s5
  $region1: #{gcn_forward.1} parent=0
    #allocation2 [shape = 'u8[65536]{0}', space=vmem, size = 0x10000, scoped, tag = 'input window, operand 3, single buffered']
    #allocation3 [shape = 's32[2]{0}', space=sflag, size = 0x8, scoped, tag = 'scoped memory for gcn_forward.1']
    #allocation4 [shape = 's32[2]{0}', space=sflag, size = 0x8, scoped, tag = 'scoped memory for gcn_forward.1']
    #allocation5 [shape = 'u8[131072]{0}', space=vmem, size = 0x20000, scoped, tag = 'output window, operand 0']
    %9 = vsyncpa [#allocation3], 0
    %10 = vsyncpa [#allocation4], 0
    %s11 = scalar_lea.sflag [#allocation4], 1
    %12 = vsyncpa %s11, 0
    loop: start=0, step=1, limit=4
    $region2: #{gcn_forward.1} parent=1 // loop_pre_header
      _
    $region3: #{gcn_forward.1} parent=1 // loop_header
      %s14 = sphi 0, %s18
      %p15 = scmp.ge.s32.totalorder %s14, 4
      %s24 = sphi 0, %s26
      %s27 = sphi 0, %s24
      %s28 = sphi 0, %s27
      %s44 = sphi 0, %s28
      %s48 = sphi 0, %s48
      %s50 = sphi 0, %s48
      %s51 = sphi 0, %s50
      %s65 = sphi 0, %s51
      %s69 = sphi 0, %s69
      %s71 = sphi 0, %s69
      %s72 = sphi 0, %s71
      %s86 = sphi 0, %s72
      %s90 = sphi 0, %s90
      %s92 = sphi 0, %s90
      %s93 = sphi 0, %s92
      %s107 = sphi 0, %s93
      %s113 = sphi 0, %s115
      %s116 = sphi 0, %s113
      %s117 = sphi 0, %s116
      %s133 = sphi 0, %s117
    $region4: #{gcn_forward.1} parent=1 // loop_header_branch
      %17 = sbr.rel (%p15) target = $region8
    $region5: #{gcn_forward.1} parent=1 // loop_body
      %s19 = ssub.s32 %s14, 1
      %s20 = ssub.s32 %s14, 2
      %s21 = sadd.s32 %s14, 1
      %s22 = ssub.s32 %s14, %s21
      %p23 = scmp.eq.s32.totalorder %s22, 0
      %s25 = sadd.s32 %s24, 1
      %s26 = scalar_select %p23, %s24, %s25
      %p29 = pneg %p23
      %p30 = scmp.eq.s32.totalorder %s14, 1
      %p31 = por %p29, %p30
      %p32 = scmp.ne.s32.totalorder %s24, %s27
      %p33 = scmp.eq.s32.totalorder %s14, 0
      %p34 = por %p32, %p33
      %p35 = scmp.ne.s32.totalorder %s24, %s27
      %p36 = scmp.eq.s32.totalorder %s19, 1
      %p37 = por %p35, %p36
      %p38 = scmp.ne.s32.totalorder %s27, %s28
      %p39 = scmp.eq.s32.totalorder %s19, 0
      %p40 = por %p38, %p39
      %p41 = scmp.ne.s32.totalorder %s27, %s28
      %p42 = scmp.eq.s32.totalorder %s20, 1
      %p43 = por %p41, %p42
      %p45 = scmp.ne.s32.totalorder %s28, %s44
      %p46 = scmp.eq.s32.totalorder %s20, 0
      %p47 = por %p45, %p46
      %s49 = sadd.s32 %s48, 1
      %p52 = scmp.eq.s32.totalorder %s14, 1
      %p53 = scmp.ne.s32.totalorder %s48, %s50
      %p54 = scmp.eq.s32.totalorder %s14, 0
      %p55 = por %p53, %p54
      %p56 = scmp.ne.s32.totalorder %s48, %s50
      %p57 = scmp.eq.s32.totalorder %s19, 1
      %p58 = por %p56, %p57
      %p59 = scmp.ne.s32.totalorder %s50, %s51
      %p60 = scmp.eq.s32.totalorder %s19, 0
      %p61 = por %p59, %p60
      %p62 = scmp.ne.s32.totalorder %s50, %s51
      %p63 = scmp.eq.s32.totalorder %s20, 1
      %p64 = por %p62, %p63
      %p66 = scmp.ne.s32.totalorder %s51, %s65
      %p67 = scmp.eq.s32.totalorder %s20, 0
      %p68 = por %p66, %p67
      %s70 = sadd.s32 %s69, 1
      %p73 = scmp.eq.s32.totalorder %s14, 1
      %p74 = scmp.ne.s32.totalorder %s69, %s71
      %p75 = scmp.eq.s32.totalorder %s14, 0
      %p76 = por %p74, %p75
      %p77 = scmp.ne.s32.totalorder %s69, %s71
      %p78 = scmp.eq.s32.totalorder %s19, 1
      %p79 = por %p77, %p78
      %p80 = scmp.ne.s32.totalorder %s71, %s72
      %p81 = scmp.eq.s32.totalorder %s19, 0
      %p82 = por %p80, %p81
      %p83 = scmp.ne.s32.totalorder %s71, %s72
      %p84 = scmp.eq.s32.totalorder %s20, 1
      %p85 = por %p83, %p84
      %p87 = scmp.ne.s32.totalorder %s72, %s86
      %p88 = scmp.eq.s32.totalorder %s20, 0
      %p89 = por %p87, %p88
      %s91 = sadd.s32 %s90, 1
      %p94 = scmp.eq.s32.totalorder %s14, 1
      %p95 = scmp.ne.s32.totalorder %s90, %s92
      %p96 = scmp.eq.s32.totalorder %s14, 0
      %p97 = por %p95, %p96
      %p98 = scmp.ne.s32.totalorder %s90, %s92
      %p99 = scmp.eq.s32.totalorder %s19, 1
      %p100 = por %p98, %p99
      %p101 = scmp.ne.s32.totalorder %s92, %s93
      %p102 = scmp.eq.s32.totalorder %s19, 0
      %p103 = por %p101, %p102
      %p104 = scmp.ne.s32.totalorder %s92, %s93
      %p105 = scmp.eq.s32.totalorder %s20, 1
      %p106 = por %p104, %p105
      %p108 = scmp.ne.s32.totalorder %s93, %s107
      %p109 = scmp.eq.s32.totalorder %s20, 0
      %p110 = por %p108, %p109
      %s111 = ssub.s32 %s14, %s21
      %p112 = scmp.eq.s32.totalorder %s111, 0
      %s114 = sadd.s32 %s113, 1
      %s115 = scalar_select %p112, %s113, %s114
      %p118 = pneg %p112
      %p119 = scmp.eq.s32.totalorder %s14, 1
      %p120 = por %p118, %p119
      %p121 = scmp.ne.s32.totalorder %s113, %s116
      %p122 = scmp.eq.s32.totalorder %s14, 0
      %p123 = por %p121, %p122
      %p124 = scmp.ne.s32.totalorder %s113, %s116
      %p125 = scmp.eq.s32.totalorder %s19, 1
      %p126 = por %p124, %p125
      %p127 = scmp.ne.s32.totalorder %s116, %s117
      %p128 = scmp.eq.s32.totalorder %s19, 0
      %p129 = por %p127, %p128
      %p130 = scmp.ne.s32.totalorder %s116, %s117
      %p131 = scmp.eq.s32.totalorder %s20, 1
      %p132 = por %p130, %p131
      %p134 = scmp.ne.s32.totalorder %s117, %s133
      %p135 = scmp.eq.s32.totalorder %s20, 0
      %p136 = por %p134, %p135
      %p137 = scmp.le.s32.totalorder 1, %s14
      %p138 = scmp.lt.s32.totalorder %s14, 3
      %p139 = pnand %p137, %p138
      %p140 = pneg %p139
      // Predicated region
      $region9: #{gcn_forward.1} parent=5 // pred_check
        _
      $region10: #{gcn_forward.1} parent=5 // pred_check_branch
        %142 = sbr.rel (%p139) target = $region12
      $region11: #{gcn_forward.1} parent=5 // pred_region
        %s143 = ssub.s32 %s14, 1
        // Predicated region
        $region13: #{gcn_forward.1} parent=11 // pred_check
          %p144 = pneg %p61
        $region14: #{gcn_forward.1} parent=11 // pred_check_branch
          %146 = sbr.rel (%p144) target = $region16
        $region15: #{gcn_forward.1} parent=11 // pred_region
          _
        $region16: #{gcn_forward.1} parent=11 // pred_fallthru
          _
        // Predicated region
        $region17: #{gcn_forward.1} parent=11 // pred_check
          %p147 = pneg %p82
        $region18: #{gcn_forward.1} parent=11 // pred_check_branch
          %149 = sbr.rel (%p147) target = $region20
        $region19: #{gcn_forward.1} parent=11 // pred_region
          _
        $region20: #{gcn_forward.1} parent=11 // pred_fallthru
          _
        // Predicated region
        $region21: #{gcn_forward.1} parent=11 // pred_check
          %p150 = pneg %p103
        $region22: #{gcn_forward.1} parent=11 // pred_check_branch
          %152 = sbr.rel (%p150) target = $region24
        $region23: #{gcn_forward.1} parent=11 // pred_region
          %154 = vsyncadd [#allocation3], 0
          %s155 = sshll.u32 %s3, 4
          %s156 = int_to_ptr.hbm [resolvable:$true] %s155
          %s157 = sshll.u32 [#allocation2], 4
          %s158 = int_to_ptr.vmem [resolvable:$true] %s157
          %163 = dma.hbm_to_vmem [thread:$0]  %s156, 2048, %s158, [#allocation3], 128, 128, 8
        $region24: #{gcn_forward.1} parent=11 // pred_fallthru
          _
      $region12: #{gcn_forward.1} parent=5 // pred_fallthru
        _
      %p164 = scmp.lt.s32.totalorder %s14, 2
      // Predicated region
      $region25: #{gcn_forward.1} parent=5 // pred_check
        %p165 = pneg %p164
      $region26: #{gcn_forward.1} parent=5 // pred_check_branch
        %167 = sbr.rel (%p165) target = $region28
      $region27: #{gcn_forward.1} parent=5 // pred_region
        // Predicated region
        $region29: #{gcn_forward.1} parent=27 // pred_check
          %p168 = pneg %p34
        $region30: #{gcn_forward.1} parent=27 // pred_check_branch
          %170 = sbr.rel (%p168) target = $region32
        $region31: #{gcn_forward.1} parent=27 // pred_region
          %p171 = scmp.lt.s32.totalorder %s14, 1
          %s172 = scalar_select %p171, %s14, 1
          %s173 = smul.addr %s172, 16
          %s174 = smul.addr %s173, 8
          %s175 = scalar_lea.vmem %s0, %s174
        $region32: #{gcn_forward.1} parent=27 // pred_fallthru
          _
      $region28: #{gcn_forward.1} parent=5 // pred_fallthru
        _
      %p176 = scmp.le.s32.totalorder 1, %s14
      %p177 = scmp.lt.s32.totalorder %s14, 3
      %p178 = pnand %p176, %p177
      %p179 = pneg %p178
      // Predicated region
      $region33: #{gcn_forward.1} parent=5 // pred_check
        _
      $region34: #{gcn_forward.1} parent=5 // pred_check_branch
        %181 = sbr.rel (%p178) target = $region36
      $region35: #{gcn_forward.1} parent=5 // pred_region
        %s182 = ssub.s32 %s14, 1
        // Predicated region
        $region37: #{gcn_forward.1} parent=35 // pred_check
          %p183 = pneg %p103
        $region38: #{gcn_forward.1} parent=35 // pred_check_branch
          %185 = sbr.rel (%p183) target = $region40
        $region39: #{gcn_forward.1} parent=35 // pred_region
          %187 = dma.done [#allocation3], 2048
        $region40: #{gcn_forward.1} parent=35 // pred_fallthru
          _
        %p188 = scmp.lt.s32.totalorder %s19, 1
        %s189 = scalar_select %p188, %s19, 1
        %s190 = smul.addr %s189, 16
        %s191 = smul.addr %s190, 8
        %s192 = scalar_lea.vmem %s0, %s191
        %p193 = pneg %p40
        %p194 = pneg %p37
        %p195 = pneg %p61
        %p196 = pneg %p58
        %p197 = pneg %p82
        %p198 = pneg %p79
        %p199 = pneg %p103
        %p200 = pneg %p100
        %p201 = pneg %p129
        %p202 = pneg %p126
        %s203 = sand.u32 %s116, 1
        %s204 = scalar_lea.sflag [#allocation4], %s203
        %s205 = sand.u32 %s116, 1
        %s206 = smul.addr %s205, 128
        %s207 = scalar_lea.vmem [#allocation5], %s206
        %p208 = scmp.lt.s32.totalorder %s19, 1
        %s209 = scalar_select %p208, %s19, 1
        %s210 = smul.addr %s209, 16
        %s211 = smul.addr %s210, 8
        %s212 = scalar_lea.vmem %s0, %s211
        %v213 = vld [vmem:[%s212] sm:$0xff]
        %v214 = vld [vmem:[%s212 + $0x8] sm:$0xff]
        %v215 = vld [vmem:[%s212 + $0x10] sm:$0xff]
        %v216 = vld [vmem:[%s212 + $0x18] sm:$0xff]
        %v217 = vld [vmem:[%s212 + $0x20] sm:$0xff]
        %v218 = vld [vmem:[%s212 + $0x28] sm:$0xff]
        %v219 = vld [vmem:[%s212 + $0x30] sm:$0xff]
        %v220 = vld [vmem:[%s212 + $0x38] sm:$0xff]
        %v221 = vld [vmem:[%s212 + $0x40] sm:$0xff]
        %v222 = vld [vmem:[%s212 + $0x48] sm:$0xff]
        %v223 = vld [vmem:[%s212 + $0x50] sm:$0xff]
        %v224 = vld [vmem:[%s212 + $0x58] sm:$0xff]
        %v225 = vld [vmem:[%s212 + $0x60] sm:$0xff]
        %v226 = vld [vmem:[%s212 + $0x68] sm:$0xff]
        %v227 = vld [vmem:[%s212 + $0x70] sm:$0xff]
        %v228 = vld [vmem:[%s212 + $0x78] sm:$0xff]
        %v229 = vld [vmem:[%s1] sm:$0xff]
        %v230 = vld [vmem:[%s1 + $0x8] sm:$0xff]
        %v231 = vld [vmem:[%s1 + $0x10] sm:$0xff]
        %v232 = vld [vmem:[%s1 + $0x18] sm:$0xff]
        %v233 = vld [vmem:[%s1 + $0x20] sm:$0xff]
        %v234 = vld [vmem:[%s1 + $0x28] sm:$0xff]
        %v235 = vld [vmem:[%s1 + $0x30] sm:$0xff]
        %v236 = vld [vmem:[%s1 + $0x38] sm:$0xff]
        %v237 = vld [vmem:[%s1 + $0x40] sm:$0xff]
        %v238 = vld [vmem:[%s1 + $0x48] sm:$0xff]
        %v239 = vld [vmem:[%s1 + $0x50] sm:$0xff]
        %v240 = vld [vmem:[%s1 + $0x58] sm:$0xff]
        %v241 = vld [vmem:[%s1 + $0x60] sm:$0xff]
        %v242 = vld [vmem:[%s1 + $0x68] sm:$0xff]
        %v243 = vld [vmem:[%s1 + $0x70] sm:$0xff]
        %v244 = vld [vmem:[%s1 + $0x78] sm:$0xff]
        %v245 = vld [vmem:[%s2] sm:$0x1]
        %v246 = vld [vmem:[#allocation2] sm:$0xff]
        %v247 = vld [vmem:[#allocation2 + $0x8] sm:$0xff]
        %v248 = vld [vmem:[#allocation2 + $0x10] sm:$0xff]
        %v249 = vld [vmem:[#allocation2 + $0x18] sm:$0xff]
        %v250 = vld [vmem:[#allocation2 + $0x20] sm:$0xff]
        %v251 = vld [vmem:[#allocation2 + $0x28] sm:$0xff]
        %v252 = vld [vmem:[#allocation2 + $0x30] sm:$0xff]
        %v253 = vld [vmem:[#allocation2 + $0x38] sm:$0xff]
        %v254 = vld [vmem:[#allocation2 + $0x40] sm:$0xff]
        %v255 = vld [vmem:[#allocation2 + $0x48] sm:$0xff]
        %v256 = vld [vmem:[#allocation2 + $0x50] sm:$0xff]
        %v257 = vld [vmem:[#allocation2 + $0x58] sm:$0xff]
        %v258 = vld [vmem:[#allocation2 + $0x60] sm:$0xff]
        %v259 = vld [vmem:[#allocation2 + $0x68] sm:$0xff]
        %v260 = vld [vmem:[#allocation2 + $0x70] sm:$0xff]
        %v261 = vld [vmem:[#allocation2 + $0x78] sm:$0xff]
        %v263 = vperm.slane %v245, 0
        %265 = vmatpush.msra.mxu0 %v244
        %266 = vmatpush.msra.mxu0 %v243
        %267 = vmatpush.msra.mxu0 %v242
        %268 = vmatpush.msra.mxu0 %v241
        %269 = vmatpush.msra.mxu0 %v240
        %270 = vmatpush.msra.mxu0 %v239
        %271 = vmatpush.msra.mxu0 %v238
        %272 = vmatpush.msra.mxu0 %v237
        %273 = vmatpush.msra.mxu0 %v236
        %274 = vmatpush.msra.mxu0 %v235
        %275 = vmatpush.msra.mxu0 %v234
        %276 = vmatpush.msra.mxu0 %v233
        %277 = vmatpush.msra.mxu0 %v232
        %278 = vmatpush.msra.mxu0 %v231
        %279 = vmatpush.msra.mxu0 %v230
        %280 = vmatpush.msra.mxu0 %v229
        %281 = vmatmul.f32.gmra.mxu0 %v213
        %v282 = vpop.f32.mrf.mxu0
        %v283 = vadd.f32 %v263, %v282
        %284 = vmatmul.f32.gmra.mxu0 %v214
        %v285 = vpop.f32.mrf.mxu0
        %v286 = vadd.f32 %v263, %v285
        %287 = vmatmul.f32.gmra.mxu0 %v215
        %v288 = vpop.f32.mrf.mxu0
        %v289 = vadd.f32 %v263, %v288
        %290 = vmatmul.f32.gmra.mxu0 %v216
        %v291 = vpop.f32.mrf.mxu0
        %v292 = vadd.f32 %v263, %v291
        %293 = vmatmul.f32.gmra.mxu0 %v217
        %v294 = vpop.f32.mrf.mxu0
        %v295 = vadd.f32 %v263, %v294
        %296 = vmatmul.f32.gmra.mxu0 %v218
        %v297 = vpop.f32.mrf.mxu0
        %v298 = vadd.f32 %v263, %v297
        %299 = vmatmul.f32.gmra.mxu0 %v219
        %v300 = vpop.f32.mrf.mxu0
        %v301 = vadd.f32 %v263, %v300
        %302 = vmatmul.f32.gmra.mxu0 %v220
        %v303 = vpop.f32.mrf.mxu0
        %v304 = vadd.f32 %v263, %v303
        %305 = vmatmul.f32.gmra.mxu0 %v221
        %v306 = vpop.f32.mrf.mxu0
        %v307 = vadd.f32 %v263, %v306
        %308 = vmatmul.f32.gmra.mxu0 %v222
        %v309 = vpop.f32.mrf.mxu0
        %v310 = vadd.f32 %v263, %v309
        %311 = vmatmul.f32.gmra.mxu0 %v223
        %v312 = vpop.f32.mrf.mxu0
        %v313 = vadd.f32 %v263, %v312
        %314 = vmatmul.f32.gmra.mxu0 %v224
        %v315 = vpop.f32.mrf.mxu0
        %v316 = vadd.f32 %v263, %v315
        %317 = vmatmul.f32.gmra.mxu0 %v225
        %v318 = vpop.f32.mrf.mxu0
        %v319 = vadd.f32 %v263, %v318
        %320 = vmatmul.f32.gmra.mxu0 %v226
        %v321 = vpop.f32.mrf.mxu0
        %v322 = vadd.f32 %v263, %v321
        %323 = vmatmul.f32.gmra.mxu0 %v227
        %v324 = vpop.f32.mrf.mxu0
        %v325 = vadd.f32 %v263, %v324
        %326 = vmatmul.f32.gmra.mxu0 %v228
        %v327 = vpop.f32.mrf.mxu0
        %v328 = vadd.f32 %v263, %v327
        %329 = vdwg.mxu0
        %v330 = vadd.f32 %v283, %v213
        %v331 = vadd.f32 %v286, %v214
        %v332 = vadd.f32 %v289, %v215
        %v333 = vadd.f32 %v292, %v216
        %v334 = vadd.f32 %v295, %v217
        %v335 = vadd.f32 %v298, %v218
        %v336 = vadd.f32 %v301, %v219
        %v337 = vadd.f32 %v304, %v220
        %v338 = vadd.f32 %v307, %v221
        %v339 = vadd.f32 %v310, %v222
        %v340 = vadd.f32 %v313, %v223
        %v341 = vadd.f32 %v316, %v224
        %v342 = vadd.f32 %v319, %v225
        %v343 = vadd.f32 %v322, %v226
        %v344 = vadd.f32 %v325, %v227
        %v345 = vadd.f32 %v328, %v228
        %v346 = vmax.f32 %v330, 0.0
        %v347 = vmax.f32 %v331, 0.0
        %v348 = vmax.f32 %v332, 0.0
        %v349 = vmax.f32 %v333, 0.0
        %v350 = vmax.f32 %v334, 0.0
        %v351 = vmax.f32 %v335, 0.0
        %v352 = vmax.f32 %v336, 0.0
        %v353 = vmax.f32 %v337, 0.0
        %v354 = vmax.f32 %v338, 0.0
        %v355 = vmax.f32 %v339, 0.0
        %v356 = vmax.f32 %v340, 0.0
        %v357 = vmax.f32 %v341, 0.0
        %v358 = vmax.f32 %v342, 0.0
        %v359 = vmax.f32 %v343, 0.0
        %v360 = vmax.f32 %v344, 0.0
        %v361 = vmax.f32 %v345, 0.0
        %362 = vmatpush.msra.mxu0 %v361
        %363 = vmatpush.msra.mxu0 %v360
        %364 = vmatpush.msra.mxu0 %v359
        %365 = vmatpush.msra.mxu0 %v358
        %366 = vmatpush.msra.mxu0 %v357
        %367 = vmatpush.msra.mxu0 %v356
        %368 = vmatpush.msra.mxu0 %v355
        %369 = vmatpush.msra.mxu0 %v354
        %370 = vmatpush.msra.mxu0 %v353
        %371 = vmatpush.msra.mxu0 %v352
        %372 = vmatpush.msra.mxu0 %v351
        %373 = vmatpush.msra.mxu0 %v350
        %374 = vmatpush.msra.mxu0 %v349
        %375 = vmatpush.msra.mxu0 %v348
        %376 = vmatpush.msra.mxu0 %v347
        %377 = vmatpush.msra.mxu0 %v346
        %378 = vmatmul.f32.gmra.mxu0 %v246
        %v379 = vpop.f32.mrf.mxu0
        %v380 = vadd.f32 0.0, %v379
        %381 = vmatmul.f32.gmra.mxu0 %v247
        %v382 = vpop.f32.mrf.mxu0
        %v383 = vadd.f32 0.0, %v382
        %384 = vmatmul.f32.gmra.mxu0 %v248
        %v385 = vpop.f32.mrf.mxu0
        %v386 = vadd.f32 0.0, %v385
        %387 = vmatmul.f32.gmra.mxu0 %v249
        %v388 = vpop.f32.mrf.mxu0
        %v389 = vadd.f32 0.0, %v388
        %390 = vmatmul.f32.gmra.mxu0 %v250
        %v391 = vpop.f32.mrf.mxu0
        %v392 = vadd.f32 0.0, %v391
        %393 = vmatmul.f32.gmra.mxu0 %v251
        %v394 = vpop.f32.mrf.mxu0
        %v395 = vadd.f32 0.0, %v394
        %396 = vmatmul.f32.gmra.mxu0 %v252
        %v397 = vpop.f32.mrf.mxu0
        %v398 = vadd.f32 0.0, %v397
        %399 = vmatmul.f32.gmra.mxu0 %v253
        %v400 = vpop.f32.mrf.mxu0
        %v401 = vadd.f32 0.0, %v400
        %402 = vmatmul.f32.gmra.mxu0 %v254
        %v403 = vpop.f32.mrf.mxu0
        %v404 = vadd.f32 0.0, %v403
        %405 = vmatmul.f32.gmra.mxu0 %v255
        %v406 = vpop.f32.mrf.mxu0
        %v407 = vadd.f32 0.0, %v406
        %408 = vmatmul.f32.gmra.mxu0 %v256
        %v409 = vpop.f32.mrf.mxu0
        %v410 = vadd.f32 0.0, %v409
        %411 = vmatmul.f32.gmra.mxu0 %v257
        %v412 = vpop.f32.mrf.mxu0
        %v413 = vadd.f32 0.0, %v412
        %414 = vmatmul.f32.gmra.mxu0 %v258
        %v415 = vpop.f32.mrf.mxu0
        %v416 = vadd.f32 0.0, %v415
        %417 = vmatmul.f32.gmra.mxu0 %v259
        %v418 = vpop.f32.mrf.mxu0
        %v419 = vadd.f32 0.0, %v418
        %420 = vmatmul.f32.gmra.mxu0 %v260
        %v421 = vpop.f32.mrf.mxu0
        %v422 = vadd.f32 0.0, %v421
        %423 = vmatmul.f32.gmra.mxu0 %v261
        %v424 = vpop.f32.mrf.mxu0
        %v425 = vadd.f32 0.0, %v424
        %426 = vdwg.mxu0
        %427 = vst [vmem:[%s207] sm:$0xff] %v380
        %428 = vst [vmem:[%s207 + $0x8] sm:$0xff] %v383
        %429 = vst [vmem:[%s207 + $0x10] sm:$0xff] %v386
        %430 = vst [vmem:[%s207 + $0x18] sm:$0xff] %v389
        %431 = vst [vmem:[%s207 + $0x20] sm:$0xff] %v392
        %432 = vst [vmem:[%s207 + $0x28] sm:$0xff] %v395
        %433 = vst [vmem:[%s207 + $0x30] sm:$0xff] %v398
        %434 = vst [vmem:[%s207 + $0x38] sm:$0xff] %v401
        %435 = vst [vmem:[%s207 + $0x40] sm:$0xff] %v404
        %436 = vst [vmem:[%s207 + $0x48] sm:$0xff] %v407
        %437 = vst [vmem:[%s207 + $0x50] sm:$0xff] %v410
        %438 = vst [vmem:[%s207 + $0x58] sm:$0xff] %v413
        %439 = vst [vmem:[%s207 + $0x60] sm:$0xff] %v416
        %440 = vst [vmem:[%s207 + $0x68] sm:$0xff] %v419
        %441 = vst [vmem:[%s207 + $0x70] sm:$0xff] %v422
        %442 = vst [vmem:[%s207 + $0x78] sm:$0xff] %v425
        %s443 = sand.u32 %s116, 1
        %s444 = scalar_lea.sflag [#allocation4], %s443
        %s445 = sand.u32 %s116, 1
        %s446 = smul.addr %s445, 128
        %s447 = scalar_lea.vmem [#allocation5], %s446
        // Predicated region
        $region41: #{gcn_forward.1} parent=35 // pred_check
          %p448 = pneg %p126
        $region42: #{gcn_forward.1} parent=35 // pred_check_branch
          %450 = sbr.rel (%p448) target = $region44
        $region43: #{gcn_forward.1} parent=35 // pred_region
          %452 = vsyncadd %s444, 0
          %s453 = smul.addr %s19, 16
          %s454 = smul.addr %s453, 8
          %s455 = scalar_lea.hbm %s4, %s454
          %s456 = sshll.u32 %s447, 4
          %s457 = int_to_ptr.vmem [resolvable:$true] %s456
          %s458 = sshll.u32 %s455, 4
          %s459 = int_to_ptr.hbm [resolvable:$true] %s458
          %464 = dma.vmem_to_hbm [thread:$0]  %s457, 2048, %s459, %s444, 128, 128, 8
        $region44: #{gcn_forward.1} parent=35 // pred_fallthru
          _
      $region36: #{gcn_forward.1} parent=5 // pred_fallthru
        _
      %p465 = scmp.le.s32.totalorder 2, %s14
      // Predicated region
      $region45: #{gcn_forward.1} parent=5 // pred_check
        %p466 = pneg %p465
      $region46: #{gcn_forward.1} parent=5 // pred_check_branch
        %468 = sbr.rel (%p466) target = $region48
      $region47: #{gcn_forward.1} parent=5 // pred_region
        %s469 = ssub.s32 %s14, 2
        // Predicated region
        $region49: #{gcn_forward.1} parent=47 // pred_check
          %p470 = pneg %p132
        $region50: #{gcn_forward.1} parent=47 // pred_check_branch
          %472 = sbr.rel (%p470) target = $region52
        $region51: #{gcn_forward.1} parent=47 // pred_region
          %s473 = sand.u32 %s117, 1
          %s474 = scalar_lea.sflag [#allocation4], %s473
          %s475 = sand.u32 %s117, 1
          %s476 = smul.addr %s475, 128
          %s477 = scalar_lea.vmem [#allocation5], %s476
          %479 = dma.done %s474, 2048
        $region52: #{gcn_forward.1} parent=47 // pred_fallthru
          _
      $region48: #{gcn_forward.1} parent=5 // pred_fallthru
        _
    $region6: #{gcn_forward.1} parent=1 // loop_footer
      %s18 = sadd.s32 1, %s14
    $region7: #{gcn_forward.1} parent=1 // loop_footer_branch
      %13 = sbr.rel target = $region3
    $region8: #{gcn_forward.1} parent=1 // loop_exit
      _
    %480 = vsyncpa [#allocation3], 1
    %s481 = scalar_lea.sflag [#allocation3], 1
    %482 = vsyncpa %s481, 1
    %483 = vsyncpa [#allocation4], 1
    %s484 = scalar_lea.sflag [#allocation4], 1
    %485 = vsyncpa %s484, 1

</llo_original>
